<compile_context>
chip_gen: v7x
topology: tpu7x:2x2x1
jax: 0.10.0
libtpu: 0.0.40
codegen_flags: <defaults>
</compile_context>

<pallas_src>
from math import sqrt

import jax
import jax.numpy as jnp
from jax.experimental import pallas as pl
from jax.experimental.pallas import tpu as pltpu


_TILE_COLS = 1024            # lane axis: multiple of 128 -> unmasked, lane-dense stores
_MAX_TILE_ROWS = 1024        # 1024 x 1024 f32 = 4 MiB tile; in+out double-buffered = 16 MiB VMEM
_PALLAS_MIN_ELEMS = 1 << 20  # below ~1M elems, XLA's fused RNG+scale beats a kernel launch


def _round_up(a: int, b: int) -> int:
    return ((a + b - 1) // b) * b


def _tile_geometry(num_elems: int):
    """Pick (tile_rows, rows_padded, grid_rows) for a (rows, 1024) f32 slab.

    Tail padding is at most 8 rows per grid step (32 KiB), never a 2x blow-up.
    """
    rows_needed = pl.cdiv(max(num_elems, 1), _TILE_COLS)
    if rows_needed <= _MAX_TILE_ROWS:
        grid_rows = 1
        tile_rows = _round_up(rows_needed, 8)
    else:
        grid_rows = pl.cdiv(rows_needed, _MAX_TILE_ROWS)
        tile_rows = _round_up(pl.cdiv(rows_needed, grid_rows), 8)
    rows_padded = tile_rows * grid_rows
    return tile_rows, rows_padded, grid_rows


# ----------------------------------------------------------------------------
# Pallas kernel: scale a pre-generated standard-normal slab by a runtime scalar.
# Pure VPU multiply on lane-dense (rows, 1024) tiles -> unmasked vst stores.
# ----------------------------------------------------------------------------
def _scale_kernel(std_ref, noise_ref, out_ref):
    # std_ref   (SMEM f32[1], scalar prefetch): the std to apply
    # noise_ref (VMEM f32 (tile_rows, 1024))  : standard-normal noise tile
    # out_ref   (VMEM f32 (tile_rows, 1024))  : scaled output tile
    out_ref[...] = noise_ref[...] * std_ref[0]


def _scale_mask_pallas(key: jax.Array, num_elems: int, std: float) -> jax.Array:
    """Returns randn(num_elems) * std, computed through the Pallas scale kernel."""
    tile_rows, rows_padded, grid_rows = _tile_geometry(num_elems)

    noise = jax.random.normal(key, (rows_padded, _TILE_COLS), dtype=jnp.float32)
    std_arr = jnp.array([std], dtype=jnp.float32)  # SMEM scalar, no recompile on N change

    slab = pl.pallas_call(
        _scale_kernel,
        out_shape=jax.ShapeDtypeStruct((rows_padded, _TILE_COLS), jnp.float32),
        grid_spec=pltpu.PrefetchScalarGridSpec(
            num_scalar_prefetch=1,
            grid=(grid_rows,),
            in_specs=[pl.BlockSpec((tile_rows, _TILE_COLS), lambda g, std: (g, 0))],
            out_specs=pl.BlockSpec((tile_rows, _TILE_COLS), lambda g, std: (g, 0)),
        ),
        compiler_params=pltpu.CompilerParams(
            dimension_semantics=("parallel",),
            vmem_limit_bytes=32 * 1024 * 1024,
        ),
    )(std_arr, noise)

    # Slab begins at element 0 -> single aligned slice (no unaligned offset-F copy).
    return slab.reshape(-1)[:num_elems]


def _init_masks(num_nodes: int, num_feat: int, num_edges: int, seed: int,
                *, use_pallas=None):
    relu_gain = sqrt(2.0)                              # torch.nn.init.calculate_gain('relu')
    node_std = 0.1
    edge_std = relu_gain * sqrt(2.0 / (2.0 * num_nodes))

    key = jax.random.PRNGKey(seed)
    k_node, k_edge = jax.random.split(key)

    # node_feat_mask is tiny (F elements): kernel-launch overhead dwarfs one multiply,
    # so it always takes the jnp path (XLA fuses the scale into its RNG kernel).
    node_mask = jax.random.normal(k_node, (num_feat,), jnp.float32) * jnp.float32(node_std)

    if use_pallas is None:
        use_pallas = num_edges >= _PALLAS_MIN_ELEMS

    if use_pallas:
        edge_mask = _scale_mask_pallas(k_edge, num_edges, edge_std)
    else:
        edge_mask = jax.random.normal(k_edge, (num_edges,), jnp.float32) * jnp.float32(edge_std)
    return node_mask, edge_mask


# ----------------------------------------------------------------------------
# JAX port of ExplainerBase (only the parts with numerical semantics).
# ----------------------------------------------------------------------------
class ExplainerBase:
    def __init__(self, epochs=0, lr=0, explain_graph=False, molecule=False,
                 nclass=4, seed=0):
        self.lr = lr
        self.epochs = epochs
        self.explain_graph = explain_graph
        self.molecule = molecule
        self.nclass = nclass
        self.seed = seed
        self.ori_pred = None
        self.ex_labels = None
        self.edge_mask = None
        self.node_feat_mask = None
        self.hard_edge_mask = None
        self.num_edges = None
        self.num_nodes = None
        # TODO(synk): MessagePassing layer discovery, networkx k-hop subgraph
        # extraction and RDKit periodic-table lookup are host-side graph
        # bookkeeping with no tensor semantics — no Pallas equivalent.

    def set_masks(self, x: jax.Array, edge_index: jax.Array, use_pallas=None):
        """__set_masks__ equivalent: mask initialization (Pallas for large edge counts)."""
        N, F = x.shape
        E = edge_index.shape[1]
        node_mask, edge_mask = _init_masks(N, F, E, self.seed, use_pallas=use_pallas)
        self.node_feat_mask = node_mask   # (F,)
        self.edge_mask = edge_mask        # (E,)
        return self.node_feat_mask, self.edge_mask

    def clear_masks(self):
        self.node_feat_mask = None
        self.edge_mask = None

    def forward(self, x: jax.Array, edge_index: jax.Array, **kwargs):
        # Exact semantics of ExplainerBase.forward: record graph sizes.
        self.num_edges = edge_index.shape[1]
        self.num_nodes = x.shape[0]
        return self.num_nodes, self.num_edges

    __call__ = forward


if __name__ == "__main__":
    # Small deterministic graph: N=64 nodes, F=32 features, E=256 edges.
    key = jax.random.PRNGKey(0)
    kx, ke = jax.random.split(key)
    N, F, E = 64, 32, 256
    x = jax.random.normal(kx, (N, F), dtype=jnp.float32)
    edge_index = jax.random.randint(ke, (2, E), 0, N, dtype=jnp.int32)

    explainer = ExplainerBase(epochs=10, lr=0.01, explain_graph=False, seed=0)

    # forward(): bookkeeping (shapes).
    num_nodes, num_edges = explainer(x, edge_index)
    assert num_nodes == N and num_edges == E

    # Mask initialization.  Force the Pallas path at demo size so the kernel is
    # exercised; in production the auto threshold routes small graphs through jnp.
    node_feat_mask, edge_mask = explainer.set_masks(x, edge_index, use_pallas=True)
    jax.block_until_ready(node_feat_mask)
    jax.block_until_ready(edge_mask)

    assert node_feat_mask.shape == (F,) and node_feat_mask.dtype == jnp.float32
    assert edge_mask.shape == (E,) and edge_mask.dtype == jnp.float32
    assert bool(jnp.all(jnp.isfinite(node_feat_mask)))
    assert bool(jnp.all(jnp.isfinite(edge_mask)))

    # Reference check: same key / same slab geometry, pure jnp.
    _, k_edge_ref = jax.random.split(jax.random.PRNGKey(explainer.seed))
    _, rows_padded_ref, _ = _tile_geometry(E)
    edge_std_ref = sqrt(2.0) * sqrt(2.0 / (2.0 * N))
    ref_edge = (jax.random.normal(k_edge_ref, (rows_padded_ref, _TILE_COLS), jnp.float32)
                .reshape(-1)[:E] * jnp.float32(edge_std_ref))
    assert bool(jnp.allclose(edge_mask, ref_edge, rtol=1e-6, atol=1e-6))

    # sanity: std scaling applied (node_std = 0.1, edge_std ≈ 0.177 for N=64)
    assert 0.0 < float(jnp.max(jnp.abs(node_feat_mask))) < 2.0
    assert 0.0 < float(jnp.max(jnp.abs(edge_mask))) < 4.0

    print("KERNEL_OK")
</pallas_src>

<mosaic_0001>
module attributes {stable_mosaic.version = 11 : i64} {
  func.func @_scale_kernel(%arg0: i32, %arg1: memref<1xf32, #tpu.memory_space<smem>>, %arg2: memref<8x1024xf32, #tpu.memory_space<vmem>>, %arg3: memref<8x1024xf32, #tpu.memory_space<vmem>>) attributes {dimension_semantics = [#tpu.dimension_semantics<parallel>], iteration_bounds = array<i64: 1>, scalar_prefetch = 1 : i64, scratch_operands = 0 : i64, tpu.core_type = #tpu.core_type<tc>, window_params = [{transform_indices = @transform_0, window_bounds = array<i64: 8, 1024>}, {transform_indices = @transform_1, window_bounds = array<i64: 8, 1024>}]} {
    %c0 = arith.constant 0 : index
    %c0_0 = arith.constant 0 : index
    %0 = vector.load %arg2[%c0, %c0_0] : memref<8x1024xf32, #tpu.memory_space<vmem>>, vector<8x1024xf32>
    %c0_1 = arith.constant 0 : index
    %1 = memref.load %arg1[%c0_1] : memref<1xf32, #tpu.memory_space<smem>>
    %2 = vector.broadcast %1 : f32 to vector<8x1024xf32>
    %3 = arith.mulf %0, %2 : vector<8x1024xf32>
    %c0_2 = arith.constant 0 : index
    %c0_3 = arith.constant 0 : index
    %4 = vector.load %arg3[%c0_2, %c0_3] : memref<8x1024xf32, #tpu.memory_space<vmem>>, vector<8x1024xf32>
    tpu.vector_store %arg3[%c0_2, %c0_3], %3 {strides = array<i32>} : memref<8x1024xf32, #tpu.memory_space<vmem>>, vector<8x1024xf32>,
    return
  }
  func.func @transform_0(%arg0: i32, %arg1: memref<1xf32, #tpu.memory_space<smem>>) -> (i32, i32) {
    %c0_i32 = arith.constant 0 : i32
    %c0_i32_0 = arith.constant 0 : i32
    return %arg0, %c0_i32 : i32, i32
  }
  func.func @transform_1(%arg0: i32, %arg1: memref<1xf32, #tpu.memory_space<smem>>) -> (i32, i32) {
    %c0_i32 = arith.constant 0 : i32
    %c0_i32_0 = arith.constant 0 : i32
    return %arg0, %c0_i32 : i32, i32
  }
}

</mosaic_0001>

<llo_original>
// kernel: tpu_custom_call.1
$region0: #{tpu_custom_call.1}
  #allocation0 [shape = 'u32[]', space=smem, size = 0x4, offset = 0x4, fixed_abs, tag = 'smem constant byte address 0x4 - core index']
  #allocation1 [shape = 'u32[144,128]{1,0:T(1,128)}', space=vmem, size = 0x12000, scoped, tag = 'internal scratch']
  #allocation2 [shape = 's32[1]{0}', space=sflag, size = 0x4, scoped, tag = 'scoped memory for tpu_custom_call.1']
  #allocation3 [shape = 'f32[1]{0:T(128)S(6)}', space=smem, size = 0x200, scoped, tag = 'prefetched SMEM operand 0']
  %s0 = inlined_call_operand.<no memory space> [shape: f32[1], index: 0, kind: input, shape index: {}]
  %s1 = inlined_call_operand.hbm [shape: f32[8,1024], index: 1, kind: input, shape index: {}]
  %s2 = inlined_call_operand.hbm [shape: f32[8,1024], index: 2, kind: output, shape index: {}]
  %s3 = sld [smem:[#allocation0]]
  $region18: #{tpu_custom_call.1} parent=0
    _
  %s5 = ssub.s32 1, %s3
  %s6 = scalar_select 0, %s5, %s3
  %7 = sst [smem:[#allocation3]] %s0
  $region1: #{tpu_custom_call.1} parent=0
    #allocation4 [shape = 'u8[32768]{0}', space=vmem, size = 0x8000, scoped, tag = 'input window, operand 1, single buffered']
    #allocation5 [shape = 's32[1]{0}', space=sflag, size = 0x4, scoped, tag = 'scoped memory for tpu_custom_call.1']
    #allocation6 [shape = 's32[1]{0}', space=sflag, size = 0x4, scoped, tag = 'scoped memory for tpu_custom_call.1']
    #allocation7 [shape = 'u8[32768]{0}', space=vmem, size = 0x8000, scoped, tag = 'output window, operand 0, single buffered']
    %8 = vsyncpa [#allocation5], 0
    %9 = vsyncpa [#allocation6], 0
    // Predicated region
    $region2: #{tpu_custom_call.1} parent=1 // pred_check
      _
    $region3: #{tpu_custom_call.1} parent=1 // pred_check_branch
      %11 = sbr.rel (0) target = $region5
    $region4: #{tpu_custom_call.1} parent=1 // pred_region
      %s13 = ssub.s32 1024, 1024
      %14 = vsyncadd [#allocation5], %s13
      %s16 = sshll.u32 [#allocation4], 4
      %s17 = int_to_ptr.vmem [resolvable:$true] %s16
      %19 = dma.hbm_to_vmem [thread:$0]  %s1, 1024, %s17, [#allocation5]
    $region5: #{tpu_custom_call.1} parent=1 // pred_fallthru
      _
    // Predicated region
    $region6: #{tpu_custom_call.1} parent=1 // pred_check
      _
    $region7: #{tpu_custom_call.1} parent=1 // pred_check_branch
      %21 = sbr.rel (0) target = $region9
    $region8: #{tpu_custom_call.1} parent=1 // pred_region
      %22 = dma.done [#allocation5], 1024
    $region9: #{tpu_custom_call.1} parent=1 // pred_fallthru
      _
    %v23 = vld [vmem:[#allocation4] sm:$0xff]
    %v24 = vld [vmem:[#allocation4 + $0x8] sm:$0xff]
    %v25 = vld [vmem:[#allocation4 + $0x10] sm:$0xff]
    %v26 = vld [vmem:[#allocation4 + $0x18] sm:$0xff]
    %v27 = vld [vmem:[#allocation4 + $0x20] sm:$0xff]
    %v28 = vld [vmem:[#allocation4 + $0x28] sm:$0xff]
    %v29 = vld [vmem:[#allocation4 + $0x30] sm:$0xff]
    %v30 = vld [vmem:[#allocation4 + $0x38] sm:$0xff]
    %s31 = sld [smem:[#allocation3]]
    %v32 = vstv %s31
    %v33 = vmul.f32 %v23, %v32
    %v34 = vmul.f32 %v24, %v32
    %v35 = vmul.f32 %v25, %v32
    %v36 = vmul.f32 %v26, %v32
    %v37 = vmul.f32 %v27, %v32
    %v38 = vmul.f32 %v28, %v32
    %v39 = vmul.f32 %v29, %v32
    %v40 = vmul.f32 %v30, %v32
    %41 = vst [vmem:[#allocation7] sm:$0xff] %v33
    %42 = vst [vmem:[#allocation7 + $0x8] sm:$0xff] %v34
    %43 = vst [vmem:[#allocation7 + $0x10] sm:$0xff] %v35
    %44 = vst [vmem:[#allocation7 + $0x18] sm:$0xff] %v36
    %45 = vst [vmem:[#allocation7 + $0x20] sm:$0xff] %v37
    %46 = vst [vmem:[#allocation7 + $0x28] sm:$0xff] %v38
    %47 = vst [vmem:[#allocation7 + $0x30] sm:$0xff] %v39
    %48 = vst [vmem:[#allocation7 + $0x38] sm:$0xff] %v40
    // Predicated region
    $region10: #{tpu_custom_call.1} parent=1 // pred_check
      _
    $region11: #{tpu_custom_call.1} parent=1 // pred_check_branch
      %50 = sbr.rel (0) target = $region13
    $region12: #{tpu_custom_call.1} parent=1 // pred_region
      %s52 = ssub.s32 1024, 1024
      %53 = vsyncadd [#allocation6], %s52
      %s55 = sshll.u32 [#allocation7], 4
      %s56 = int_to_ptr.vmem [resolvable:$true] %s55
      %58 = dma.vmem_to_hbm [thread:$0]  %s56, 1024, %s2, [#allocation6]
    $region13: #{tpu_custom_call.1} parent=1 // pred_fallthru
      _
    // Predicated region
    $region14: #{tpu_custom_call.1} parent=1 // pred_check
      _
    $region15: #{tpu_custom_call.1} parent=1 // pred_check_branch
      %60 = sbr.rel (0) target = $region17
    $region16: #{tpu_custom_call.1} parent=1 // pred_region
      %61 = dma.done [#allocation6], 1024
    $region17: #{tpu_custom_call.1} parent=1 // pred_fallthru
      _
    %62 = vsyncpa [#allocation5], 1
    %63 = vsyncpa [#allocation6], 1

</llo_original>
